<compile_context>
chip_gen: v6e
topology: v6e:2x2x1
jax: 0.10.0
libtpu: 0.0.40
codegen_flags: <defaults>
</compile_context>

<pallas_src>
import functools

import jax
import jax.numpy as jnp
from jax.experimental import pallas as pl
from jax.experimental.pallas import tpu as pltpu


LN_EPS = 1e-5


def _round_up(x, m):
    return ((x + m - 1) // m) * m


def _w_row_offsets(feats):
    """Row offset of each layer's transposed-weight block in the weight slab.

    Layer i occupies rows [off_i, off_i + feats[i+1]) (zero-padded up to the
    next multiple of 8).  Shared by pack_params and the kernel.
    """
    offs, off = [], 0
    for i in range(len(feats) - 1):
        offs.append(off)
        off += _round_up(feats[i + 1], 8)
    return offs, off


def _mish_fast(x):
    # mish(x) = x * tanh(softplus(x)).  With e = exp(x):
    #   tanh(log(1+e)) = ((1+e)^2 - 1) / ((1+e)^2 + 1) = e(e+2) / (e(e+2) + 2)
    # Single EUP exp, no cancellation for negative x.  Clamp so exp can't
    # overflow (for x >= 20 the ratio is 1 to ~1e-17).
    e = jnp.exp(jnp.minimum(x, 20.0))
    num = e * (e + 2.0)
    # (pl.reciprocal(num + 2.0, approx=True) is a further EUP saving if the
    #  tolerance budget allows; exact divide keeps f32 parity here.)
    return x * num / (num + 2.0)


def s_decoder_kernel(feats, x_ref, w_ref, r_ref, out_ref):
    """One batch tile of the whole MLP, feature-major.

    x_ref   : (TILE_B, dim_u)                     batch-major input tile
    w_ref   : (sum(round_up(fout_i, 8)), FIN_PAD) packed transposed weights;
              layer i in rows [off_i, off_i + fout_i), cols [:fin_i]
              (output layer read with its zero pad rows -> lane-dense store).
    r_ref   : (max_fout_pad8, 128) packed column params:
              cols 3i, 3i+1, 3i+2 = bias / gamma / beta of hidden layer i,
              col 3*n_hidden = output bias (zero beyond n_batches).
    out_ref : (round_up(n_batches, 8), TILE_B)    feature-major output tile
    """
    n_layers = len(feats) - 1
    n_hidden = n_layers - 1
    offs, _ = _w_row_offsets(feats)

    # Feature-major activations: features on sublanes, batch on lanes.
    h = x_ref[...].astype(jnp.float32).T                      # (dim_u, TILE_B)

    for i in range(n_hidden):
        fin, fout = feats[i], feats[i + 1]
        w_t = w_ref[offs[i]:offs[i] + fout, :fin]              # (fout, fin)
        b = r_ref[:fout, 3 * i:3 * i + 1]                      # (fout, 1)
        g = r_ref[:fout, 3 * i + 1:3 * i + 2]
        be = r_ref[:fout, 3 * i + 2:3 * i + 3]
        h = jnp.dot(w_t, h, preferred_element_type=jnp.float32) + b
        # LayerNorm over the feature (sublane) axis, exact unpadded width.
        mu = jnp.mean(h, axis=0, keepdims=True)
        var = jnp.mean((h - mu) ** 2, axis=0, keepdims=True)
        h = (h - mu) * jax.lax.rsqrt(var + LN_EPS) * g + be
        h = _mish_fast(h)
        # TODO(synk): Dropout is identity in eval mode; training-mode dropout
        # would use pltpu.prng_seed / pltpu.stateful_bernoulli here.

    fin, n_out = feats[-2], feats[-1]
    rows = _round_up(n_out, 8)
    w_t = w_ref[offs[-1]:offs[-1] + rows, :fin]                # zero pad rows
    b = r_ref[:rows, 3 * n_hidden:3 * n_hidden + 1]            # zero pad rows
    out = jnp.dot(w_t, h, preferred_element_type=jnp.float32) + b
    out_ref[...] = out.astype(out_ref.dtype)   # lane-dense (rows, TILE_B) store


def init_s_decoder_params(key, dim_u, dims_dec_s, n_batches):
    """Deterministic parameter init (PyTorch-Linear-style uniform).

    Returns a list of per-layer tuples:
      hidden layer: (W (fin,fout), b (1,fout), gamma (1,fout), beta (1,fout))
      output layer: (W (fin,fout), b (1,fout))
    """
    feats = [dim_u] + list(dims_dec_s) + [n_batches]
    layers = []
    n_layers = len(feats) - 1
    for i in range(n_layers):
        fin, fout = feats[i], feats[i + 1]
        key, kw, kb = jax.random.split(key, 3)
        bound = 1.0 / float(fin) ** 0.5
        W = jax.random.uniform(kw, (fin, fout), jnp.float32, -bound, bound)
        b = jax.random.uniform(kb, (1, fout), jnp.float32, -bound, bound)
        if i < n_layers - 1:
            gamma = jnp.ones((1, fout), jnp.float32)
            beta = jnp.zeros((1, fout), jnp.float32)
            layers.append((W, b, gamma, beta))
        else:
            layers.append((W, b))
    return layers


def pack_params(layers, feats):
    """Pack parameters into two lane-dense slabs (see kernel docstring)."""
    n_layers = len(feats) - 1
    n_hidden = n_layers - 1
    offs, w_rows = _w_row_offsets(feats)
    w_cols = max(128, _round_up(max(feats[:-1]), 128))
    r_rows = max(8, _round_up(max(feats[1:]), 8))
    r_cols = max(128, _round_up(3 * n_hidden + 1, 128))

    w_slab = jnp.zeros((w_rows, w_cols), jnp.float32)
    r_slab = jnp.zeros((r_rows, r_cols), jnp.float32)

    for i in range(n_layers):
        fin, fout = feats[i], feats[i + 1]
        W, b = layers[i][0], layers[i][1]
        w_slab = w_slab.at[offs[i]:offs[i] + fout, :fin].set(W.T)
        if i < n_hidden:
            g, be = layers[i][2], layers[i][3]
            r_slab = r_slab.at[:fout, 3 * i].set(b.reshape(-1))
            r_slab = r_slab.at[:fout, 3 * i + 1].set(g.reshape(-1))
            r_slab = r_slab.at[:fout, 3 * i + 2].set(be.reshape(-1))
        else:
            r_slab = r_slab.at[:fout, 3 * n_hidden].set(b.reshape(-1))
    return w_slab, r_slab


def s_decoder_forward(x, w_slab, r_slab, feats, *, tile_b=4096):
    """Pallas forward pass.  Returns (B, n_batches)."""
    B = x.shape[0]
    dim_u = feats[0]
    n_batches = feats[-1]
    n_out_pad = _round_up(n_batches, 8)

    # Batch lives on the LANE axis inside the kernel -> tile_b multiple of 128.
    tile_b = max(128, _round_up(tile_b, 128))
    tile_b = min(tile_b, _round_up(max(B, 1), 128))
    # v7x has 2 TensorCores: make sure a large batch yields >= 2 grid steps so
    # dimension_semantics=("parallel",) can shard them.
    if _round_up(B, tile_b) // tile_b < 2 and B >= 256:
        tile_b = max(128, _round_up((B + 1) // 2, 128))
    b_pad = _round_up(B, tile_b)
    if b_pad != B:
        x = jnp.pad(x, ((0, b_pad - B), (0, 0)))
    grid = (b_pad // tile_b,)

    # Advisory cost estimate for XLA scheduling.
    flops = 2 * b_pad * sum(feats[i] * feats[i + 1] for i in range(len(feats) - 1))
    transcendentals = b_pad * sum(feats[1:-1])  # ~one exp per hidden activation
    bytes_accessed = 4 * (b_pad * dim_u + n_out_pad * b_pad
                          + w_slab.size + r_slab.size)

    out = pl.pallas_call(
        functools.partial(s_decoder_kernel, tuple(feats)),
        out_shape=jax.ShapeDtypeStruct((n_out_pad, b_pad), jnp.float32),
        grid=grid,
        in_specs=[
            pl.BlockSpec((tile_b, dim_u), lambda i: (i, 0)),   # x: tiled on batch
            pl.BlockSpec(w_slab.shape, lambda i: (0, 0)),      # weights: resident
            pl.BlockSpec(r_slab.shape, lambda i: (0, 0)),      # row params: resident
        ],
        out_specs=pl.BlockSpec((n_out_pad, tile_b), lambda i: (0, i)),
        compiler_params=pltpu.CompilerParams(
            dimension_semantics=("parallel",)),
        cost_estimate=pl.CostEstimate(
            flops=flops,
            transcendentals=transcendentals,
            bytes_accessed=bytes_accessed),
    )(x, w_slab, r_slab)

    # Kernel output is feature-major (n_out_pad, b_pad); slice + transpose back.
    return out[:n_batches, :B].T


def s_decoder_reference(x, layers):
    """Pure-JAX reference (standard mish / layernorm formulations)."""
    h = x.astype(jnp.float32)
    for layer in layers:
        W, b = layer[0], layer[1]
        h = h @ W + b
        if len(layer) == 4:  # hidden layer
            g, be = layer[2], layer[3]
            mu = jnp.mean(h, axis=-1, keepdims=True)
            var = jnp.mean((h - mu) ** 2, axis=-1, keepdims=True)
            h = (h - mu) * jax.lax.rsqrt(var + LN_EPS) * g + be
            h = h * jnp.tanh(jax.nn.softplus(h))
    return h


if __name__ == "__main__":
    # Small shapes consistent with S_Decoder(n_batches, dims_dec_s, dim_u, 'ln', drop)
    batch_size = 8
    dim_u = 32
    dims_dec_s = [16, 16]
    n_batches = 4
    feats = [dim_u] + dims_dec_s + [n_batches]

    key = jax.random.PRNGKey(0)
    kx, kp = jax.random.split(key)
    x = jax.random.normal(kx, (batch_size, dim_u), jnp.float32)

    layers = init_s_decoder_params(kp, dim_u, dims_dec_s, n_batches)
    w_slab, r_slab = pack_params(layers, feats)

    out = s_decoder_forward(x, w_slab, r_slab, feats)
    out = jax.block_until_ready(out)

    ref = s_decoder_reference(x, layers)
    assert out.shape == (batch_size, n_batches), out.shape
    assert jnp.allclose(out, ref, atol=1e-4, rtol=1e-4), (
        float(jnp.max(jnp.abs(out - ref)))
    )
    print("KERNEL_OK")
</pallas_src>

<mosaic_0001>
module attributes {stable_mosaic.version = 11 : i64} {
  func.func @s_decoder_kernel(%arg0: i32, %arg1: memref<128x32xf32, #tpu.memory_space<vmem>>, %arg2: memref<40x128xf32, #tpu.memory_space<vmem>>, %arg3: memref<16x128xf32, #tpu.memory_space<vmem>>, %arg4: memref<8x128xf32, #tpu.memory_space<vmem>>) attributes {dimension_semantics = [#tpu.dimension_semantics<parallel>], iteration_bounds = array<i64: 1>, scalar_prefetch = 0 : i64, scratch_operands = 0 : i64, tpu.core_type = #tpu.core_type<tc>, window_params = [{transform_indices = @transform_0, window_bounds = array<i64: 128, 32>}, {pipeline_mode = #tpu.pipeline_mode<synchronous>, transform_indices = @transform_1, window_bounds = array<i64: 40, 128>}, {pipeline_mode = #tpu.pipeline_mode<synchronous>, transform_indices = @transform_2, window_bounds = array<i64: 16, 128>}, {transform_indices = @transform_3, window_bounds = array<i64: 8, 128>}]} {
    %c0 = arith.constant 0 : index
    %c0_0 = arith.constant 0 : index
    %0 = vector.load %arg1[%c0, %c0_0] : memref<128x32xf32, #tpu.memory_space<vmem>>, vector<128x32xf32>
    %1 = tpu.transpose %0, [1, 0] : vector<128x32xf32> -> vector<32x128xf32>
    %c0_1 = arith.constant 0 : index
    %c0_2 = arith.constant 0 : index
    %2 = vector.load %arg2[%c0_1, %c0_2] : memref<40x128xf32, #tpu.memory_space<vmem>>, vector<16x32xf32>
    %c0_3 = arith.constant 0 : index
    %c0_4 = arith.constant 0 : index
    %3 = vector.load %arg3[%c0_3, %c0_4] : memref<16x128xf32, #tpu.memory_space<vmem>>, vector<16x1xf32>
    %c0_5 = arith.constant 0 : index
    %c1 = arith.constant 1 : index
    %4 = vector.load %arg3[%c0_5, %c1] : memref<16x128xf32, #tpu.memory_space<vmem>>, vector<16x1xf32>
    %c0_6 = arith.constant 0 : index
    %c2 = arith.constant 2 : index
    %5 = vector.load %arg3[%c0_6, %c2] : memref<16x128xf32, #tpu.memory_space<vmem>>, vector<16x1xf32>
    %cst = arith.constant dense<0.000000e+00> : vector<16x128xf32>
    %6 = tpu.matmul %2, %1, %cst {dimension_numbers = #tpu.dot_dimension_numbers<[1], [0], [0], [1], [0, 0, 1, 1], [], []>} : vector<16x32xf32>, vector<32x128xf32>, vector<16x128xf32> -> vector<16x128xf32>
    %7 = vector.broadcast %3 : vector<16x1xf32> to vector<16x128xf32>
    %8 = arith.addf %6, %7 : vector<16x128xf32>
    %cst_7 = arith.constant dense<0.000000e+00> : vector<128xf32>
    %9 = vector.multi_reduction <add>, %8, %cst_7 [0] : vector<16x128xf32> to vector<128xf32>
    %10 = vector.shape_cast %9 : vector<128xf32> to vector<1x128xf32>
    %cst_8 = arith.constant 1.600000e+01 : f32
    %11 = vector.broadcast %cst_8 : f32 to vector<1x128xf32>
    %12 = arith.divf %10, %11 : vector<1x128xf32>
    %13 = vector.broadcast %12 : vector<1x128xf32> to vector<16x128xf32>
    %14 = arith.subf %8, %13 : vector<16x128xf32>
    %15 = arith.mulf %14, %14 : vector<16x128xf32>
    %cst_9 = arith.constant dense<0.000000e+00> : vector<128xf32>
    %16 = vector.multi_reduction <add>, %15, %cst_9 [0] : vector<16x128xf32> to vector<128xf32>
    %17 = vector.shape_cast %16 : vector<128xf32> to vector<1x128xf32>
    %cst_10 = arith.constant 1.600000e+01 : f32
    %18 = vector.broadcast %cst_10 : f32 to vector<1x128xf32>
    %19 = arith.divf %17, %18 : vector<1x128xf32>
    %20 = vector.broadcast %12 : vector<1x128xf32> to vector<16x128xf32>
    %21 = arith.subf %8, %20 : vector<16x128xf32>
    %cst_11 = arith.constant 9.99999974E-6 : f32
    %22 = vector.broadcast %cst_11 : f32 to vector<1x128xf32>
    %23 = arith.addf %19, %22 : vector<1x128xf32>
    %24 = math.rsqrt %23 : vector<1x128xf32>
    %25 = vector.broadcast %24 : vector<1x128xf32> to vector<16x128xf32>
    %26 = arith.mulf %21, %25 : vector<16x128xf32>
    %27 = vector.broadcast %4 : vector<16x1xf32> to vector<16x128xf32>
    %28 = arith.mulf %26, %27 : vector<16x128xf32>
    %29 = vector.broadcast %5 : vector<16x1xf32> to vector<16x128xf32>
    %30 = arith.addf %28, %29 : vector<16x128xf32>
    %cst_12 = arith.constant 2.000000e+01 : f32
    %31 = vector.broadcast %cst_12 : f32 to vector<16x128xf32>
    %32 = arith.minimumf %30, %31 : vector<16x128xf32>
    %33 = math.exp %32 : vector<16x128xf32>
    %cst_13 = arith.constant 2.000000e+00 : f32
    %34 = vector.broadcast %cst_13 : f32 to vector<16x128xf32>
    %35 = arith.addf %33, %34 : vector<16x128xf32>
    %36 = arith.mulf %33, %35 : vector<16x128xf32>
    %37 = arith.mulf %30, %36 : vector<16x128xf32>
    %cst_14 = arith.constant 2.000000e+00 : f32
    %38 = vector.broadcast %cst_14 : f32 to vector<16x128xf32>
    %39 = arith.addf %36, %38 : vector<16x128xf32>
    %40 = arith.divf %37, %39 : vector<16x128xf32>
    %c16 = arith.constant 16 : index
    %c0_15 = arith.constant 0 : index
    %41 = vector.load %arg2[%c16, %c0_15] : memref<40x128xf32, #tpu.memory_space<vmem>>, vector<16x16xf32>
    %c0_16 = arith.constant 0 : index
    %c3 = arith.constant 3 : index
    %42 = vector.load %arg3[%c0_16, %c3] : memref<16x128xf32, #tpu.memory_space<vmem>>, vector<16x1xf32>
    %c0_17 = arith.constant 0 : index
    %c4 = arith.constant 4 : index
    %43 = vector.load %arg3[%c0_17, %c4] : memref<16x128xf32, #tpu.memory_space<vmem>>, vector<16x1xf32>
    %c0_18 = arith.constant 0 : index
    %c5 = arith.constant 5 : index
    %44 = vector.load %arg3[%c0_18, %c5] : memref<16x128xf32, #tpu.memory_space<vmem>>, vector<16x1xf32>
    %cst_19 = arith.constant dense<0.000000e+00> : vector<16x128xf32>
    %45 = tpu.matmul %41, %40, %cst_19 {dimension_numbers = #tpu.dot_dimension_numbers<[1], [0], [0], [1], [0, 0, 1, 1], [], []>} : vector<16x16xf32>, vector<16x128xf32>, vector<16x128xf32> -> vector<16x128xf32>
    %46 = vector.broadcast %42 : vector<16x1xf32> to vector<16x128xf32>
    %47 = arith.addf %45, %46 : vector<16x128xf32>
    %cst_20 = arith.constant dense<0.000000e+00> : vector<128xf32>
    %48 = vector.multi_reduction <add>, %47, %cst_20 [0] : vector<16x128xf32> to vector<128xf32>
    %49 = vector.shape_cast %48 : vector<128xf32> to vector<1x128xf32>
    %cst_21 = arith.constant 1.600000e+01 : f32
    %50 = vector.broadcast %cst_21 : f32 to vector<1x128xf32>
    %51 = arith.divf %49, %50 : vector<1x128xf32>
    %52 = vector.broadcast %51 : vector<1x128xf32> to vector<16x128xf32>
    %53 = arith.subf %47, %52 : vector<16x128xf32>
    %54 = arith.mulf %53, %53 : vector<16x128xf32>
    %cst_22 = arith.constant dense<0.000000e+00> : vector<128xf32>
    %55 = vector.multi_reduction <add>, %54, %cst_22 [0] : vector<16x128xf32> to vector<128xf32>
    %56 = vector.shape_cast %55 : vector<128xf32> to vector<1x128xf32>
    %cst_23 = arith.constant 1.600000e+01 : f32
    %57 = vector.broadcast %cst_23 : f32 to vector<1x128xf32>
    %58 = arith.divf %56, %57 : vector<1x128xf32>
    %59 = vector.broadcast %51 : vector<1x128xf32> to vector<16x128xf32>
    %60 = arith.subf %47, %59 : vector<16x128xf32>
    %cst_24 = arith.constant 9.99999974E-6 : f32
    %61 = vector.broadcast %cst_24 : f32 to vector<1x128xf32>
    %62 = arith.addf %58, %61 : vector<1x128xf32>
    %63 = math.rsqrt %62 : vector<1x128xf32>
    %64 = vector.broadcast %63 : vector<1x128xf32> to vector<16x128xf32>
    %65 = arith.mulf %60, %64 : vector<16x128xf32>
    %66 = vector.broadcast %43 : vector<16x1xf32> to vector<16x128xf32>
    %67 = arith.mulf %65, %66 : vector<16x128xf32>
    %68 = vector.broadcast %44 : vector<16x1xf32> to vector<16x128xf32>
    %69 = arith.addf %67, %68 : vector<16x128xf32>
    %cst_25 = arith.constant 2.000000e+01 : f32
    %70 = vector.broadcast %cst_25 : f32 to vector<16x128xf32>
    %71 = arith.minimumf %69, %70 : vector<16x128xf32>
    %72 = math.exp %71 : vector<16x128xf32>
    %cst_26 = arith.constant 2.000000e+00 : f32
    %73 = vector.broadcast %cst_26 : f32 to vector<16x128xf32>
    %74 = arith.addf %72, %73 : vector<16x128xf32>
    %75 = arith.mulf %72, %74 : vector<16x128xf32>
    %76 = arith.mulf %69, %75 : vector<16x128xf32>
    %cst_27 = arith.constant 2.000000e+00 : f32
    %77 = vector.broadcast %cst_27 : f32 to vector<16x128xf32>
    %78 = arith.addf %75, %77 : vector<16x128xf32>
    %79 = arith.divf %76, %78 : vector<16x128xf32>
    %c32 = arith.constant 32 : index
    %c0_28 = arith.constant 0 : index
    %80 = vector.load %arg2[%c32, %c0_28] : memref<40x128xf32, #tpu.memory_space<vmem>>, vector<8x16xf32>
    %c0_29 = arith.constant 0 : index
    %c6 = arith.constant 6 : index
    %81 = vector.load %arg3[%c0_29, %c6] : memref<16x128xf32, #tpu.memory_space<vmem>>, vector<8x1xf32>
    %cst_30 = arith.constant dense<0.000000e+00> : vector<8x128xf32>
    %82 = tpu.matmul %80, %79, %cst_30 {dimension_numbers = #tpu.dot_dimension_numbers<[1], [0], [0], [1], [0, 0, 1, 1], [], []>} : vector<8x16xf32>, vector<16x128xf32>, vector<8x128xf32> -> vector<8x128xf32>
    %83 = vector.broadcast %81 : vector<8x1xf32> to vector<8x128xf32>
    %84 = arith.addf %82, %83 : vector<8x128xf32>
    %c0_31 = arith.constant 0 : index
    %c0_32 = arith.constant 0 : index
    %85 = vector.load %arg4[%c0_31, %c0_32] : memref<8x128xf32, #tpu.memory_space<vmem>>, vector<8x128xf32>
    tpu.vector_store %arg4[%c0_31, %c0_32], %84 {strides = array<i32>} : memref<8x128xf32, #tpu.memory_space<vmem>>, vector<8x128xf32>,
    return
  }
  func.func @transform_0(%arg0: i32) -> (i32, i32) {
    %c0_i32 = arith.constant 0 : i32
    %c0_i32_0 = arith.constant 0 : i32
    return %arg0, %c0_i32 : i32, i32
  }
  func.func @transform_1(%arg0: i32) -> (i32, i32) {
    %c0_i32 = arith.constant 0 : i32
    %c0_i32_0 = arith.constant 0 : i32
    %c0_i32_1 = arith.constant 0 : i32
    return %c0_i32, %c0_i32_0 : i32, i32
  }
  func.func @transform_2(%arg0: i32) -> (i32, i32) {
    %c0_i32 = arith.constant 0 : i32
    %c0_i32_0 = arith.constant 0 : i32
    %c0_i32_1 = arith.constant 0 : i32
    return %c0_i32, %c0_i32_0 : i32, i32
  }
  func.func @transform_3(%arg0: i32) -> (i32, i32) {
    %c0_i32 = arith.constant 0 : i32
    %c0_i32_0 = arith.constant 0 : i32
    return %c0_i32, %arg0 : i32, i32
  }
}

</mosaic_0001>

<llo_original>
// kernel: tpu_custom_call.1
$region0: #{tpu_custom_call.1}
  #allocation0 [shape = 'u32[]', space=smem, size = 0x4, offset = 0x4, fixed_abs, tag = 'smem constant byte address 0x4 - core index']
  #allocation1 [shape = 'u32[144,128]{1,0:T(1,128)}', space=vmem, size = 0x12000, scoped, tag = 'internal scratch']
  %s0 = inlined_call_operand.vmem [shape: f32[128,32], index: 0, kind: input, shape index: {}]
  %s1 = inlined_call_operand.vmem [shape: f32[40,128], index: 1, kind: input, shape index: {}]
  %s2 = inlined_call_operand.vmem [shape: f32[16,128], index: 2, kind: input, shape index: {}]
  %s3 = inlined_call_operand.hbm [shape: f32[8,128], index: 3, kind: output, shape index: {}]
  %s4 = sld [smem:[#allocation0]]
  $region22: #{tpu_custom_call.1} parent=0
    _
  %s6 = ssub.s32 1, %s4
  %s7 = scalar_select 0, %s6, %s4
  $region1: #{tpu_custom_call.1} parent=0
    #allocation2 [shape = 'u8[4096]{0}', space=vmem, size = 0x1000, scoped, tag = 'output window, operand 0, single buffered']
    #allocation3 [shape = 's32[1]{0}', space=sflag, size = 0x4, scoped, tag = 'scoped memory for tpu_custom_call.1']
    %8 = vsyncpa [#allocation3], 0
    // Predicated region
    $region2: #{tpu_custom_call.1} parent=1 // pred_check
      _
    $region3: #{tpu_custom_call.1} parent=1 // pred_check_branch
      %10 = sbr.rel (0) target = $region5
    $region4: #{tpu_custom_call.1} parent=1 // pred_region
      _
    $region5: #{tpu_custom_call.1} parent=1 // pred_fallthru
      _
    // Predicated region
    $region6: #{tpu_custom_call.1} parent=1 // pred_check
      _
    $region7: #{tpu_custom_call.1} parent=1 // pred_check_branch
      %12 = sbr.rel (0) target = $region9
    $region8: #{tpu_custom_call.1} parent=1 // pred_region
      _
    $region9: #{tpu_custom_call.1} parent=1 // pred_fallthru
      _
    // Predicated region
    $region10: #{tpu_custom_call.1} parent=1 // pred_check
      _
    $region11: #{tpu_custom_call.1} parent=1 // pred_check_branch
      %14 = sbr.rel (0) target = $region13
    $region12: #{tpu_custom_call.1} parent=1 // pred_region
      _
    $region13: #{tpu_custom_call.1} parent=1 // pred_fallthru
      _
    %v15 = vld [vmem:[%s0] sm:$0xff]
    %v16 = vld [vmem:[%s0 + $0x8] sm:$0xff]
    %v17 = vld [vmem:[%s0 + $0x10] sm:$0xff]
    %v18 = vld [vmem:[%s0 + $0x18] sm:$0xff]
    %v19 = vld [vmem:[%s0 + $0x20] sm:$0xff]
    %v20 = vld [vmem:[%s0 + $0x28] sm:$0xff]
    %v21 = vld [vmem:[%s0 + $0x30] sm:$0xff]
    %v22 = vld [vmem:[%s0 + $0x38] sm:$0xff]
    %v23 = vld [vmem:[%s0 + $0x40] sm:$0xff]
    %v24 = vld [vmem:[%s0 + $0x48] sm:$0xff]
    %v25 = vld [vmem:[%s0 + $0x50] sm:$0xff]
    %v26 = vld [vmem:[%s0 + $0x58] sm:$0xff]
    %v27 = vld [vmem:[%s0 + $0x60] sm:$0xff]
    %v28 = vld [vmem:[%s0 + $0x68] sm:$0xff]
    %v29 = vld [vmem:[%s0 + $0x70] sm:$0xff]
    %v30 = vld [vmem:[%s0 + $0x78] sm:$0xff]
    %v31 = vld [vmem:[%s1] sm:$0xff]
    %v32 = vld [vmem:[%s1 + $0x8] sm:$0xff]
    %v33 = vld [vmem:[%s2] sm:$0xff]
    %v34 = vld [vmem:[%s2 + $0x8] sm:$0xff]
    %36 = vset.pattern.permute.xlu0 0
    %37 = vperm.xlu0 %36, %v33
    %v38 = vpop.permute.xlu0 %37
    %41 = vset.pattern.permute.xlu0 0
    %42 = vperm.xlu0 %41, %v34
    %v43 = vpop.permute.xlu0 %42
    %vm45 = vcmask 261120
    %v47 = vsel %vm45, %v31, 0
    %v50 = vsel %vm45, %v32, 0
    %v53 = vsel %vm45, %v15, 0
    %v56 = vsel %vm45, %v16, 0
    %v59 = vsel %vm45, %v17, 0
    %v62 = vsel %vm45, %v18, 0
    %v65 = vsel %vm45, %v19, 0
    %v68 = vsel %vm45, %v20, 0
    %v71 = vsel %vm45, %v21, 0
    %v74 = vsel %vm45, %v22, 0
    %v77 = vsel %vm45, %v23, 0
    %v80 = vsel %vm45, %v24, 0
    %v83 = vsel %vm45, %v25, 0
    %v86 = vsel %vm45, %v26, 0
    %v89 = vsel %vm45, %v27, 0
    %v92 = vsel %vm45, %v28, 0
    %v95 = vsel %vm45, %v29, 0
    %v98 = vsel %vm45, %v30, 0
    %100 = vmatprep.subr.mxu0 0.0
    %101 = vmatpush1.xpose.msra.mxu0 %v98
    %102 = vmatprep.subr.mxu0 0.0
    %103 = vmatpush1.xpose.msra.mxu0 %v95
    %104 = vmatprep.subr.mxu0 0.0
    %105 = vmatpush1.xpose.msra.mxu0 %v92
    %106 = vmatprep.subr.mxu0 0.0
    %107 = vmatpush1.xpose.msra.mxu0 %v89
    %108 = vmatprep.subr.mxu0 0.0
    %109 = vmatpush1.xpose.msra.mxu0 %v86
    %110 = vmatprep.subr.mxu0 0.0
    %111 = vmatpush1.xpose.msra.mxu0 %v83
    %112 = vmatprep.subr.mxu0 0.0
    %113 = vmatpush1.xpose.msra.mxu0 %v80
    %114 = vmatprep.subr.mxu0 0.0
    %115 = vmatpush1.xpose.msra.mxu0 %v77
    %116 = vmatprep.subr.mxu0 0.0
    %117 = vmatpush1.xpose.msra.mxu0 %v74
    %118 = vmatprep.subr.mxu0 0.0
    %119 = vmatpush1.xpose.msra.mxu0 %v71
    %120 = vmatprep.subr.mxu0 0.0
    %121 = vmatpush1.xpose.msra.mxu0 %v68
    %122 = vmatprep.subr.mxu0 0.0
    %123 = vmatpush1.xpose.msra.mxu0 %v65
    %124 = vmatprep.subr.mxu0 0.0
    %125 = vmatpush1.xpose.msra.mxu0 %v62
    %126 = vmatprep.subr.mxu0 0.0
    %127 = vmatpush1.xpose.msra.mxu0 %v59
    %128 = vmatprep.subr.mxu0 0.0
    %129 = vmatpush1.xpose.msra.mxu0 %v56
    %130 = vmatprep.subr.mxu0 0.0
    %131 = vmatpush1.xpose.msra.mxu0 %v53
    %132 = vmatprep.subr.mxu0 0.0
    %133 = vmatpush2.xpose.msra.mxu0 0.0
    %134 = vmatprep.subr.mxu0 0.0
    %135 = vmatpush2.xpose.msra.mxu0 0.0
    %136 = vmatprep.subr.mxu0 0.0
    %137 = vmatpush2.xpose.msra.mxu0 0.0
    %138 = vmatprep.subr.mxu0 0.0
    %139 = vmatpush2.xpose.msra.mxu0 0.0
    %140 = vmatprep.subr.mxu0 0.0
    %141 = vmatpush2.xpose.msra.mxu0 0.0
    %142 = vmatprep.subr.mxu0 0.0
    %143 = vmatpush2.xpose.msra.mxu0 0.0
    %144 = vmatprep.subr.mxu0 0.0
    %145 = vmatpush2.xpose.msra.mxu0 0.0
    %146 = vmatprep.subr.mxu0 0.0
    %147 = vmatpush2.xpose.msra.mxu0 0.0
    %148 = vmatprep.subr.mxu0 0.0
    %149 = vmatpush2.xpose.msra.mxu0 0.0
    %150 = vmatprep.subr.mxu0 0.0
    %151 = vmatpush2.xpose.msra.mxu0 0.0
    %152 = vmatprep.subr.mxu0 0.0
    %153 = vmatpush2.xpose.msra.mxu0 0.0
    %154 = vmatprep.subr.mxu0 0.0
    %155 = vmatpush2.xpose.msra.mxu0 0.0
    %156 = vmatprep.subr.mxu0 0.0
    %157 = vmatpush2.xpose.msra.mxu0 0.0
    %158 = vmatprep.subr.mxu0 0.0
    %159 = vmatpush2.xpose.msra.mxu0 0.0
    %160 = vmatprep.subr.mxu0 0.0
    %161 = vmatpush2.xpose.msra.mxu0 0.0
    %162 = vmatprep.subr.mxu0 0.0
    %163 = vmatpush2.xpose.msra.mxu0 0.0
    %164 = vmatprep.mubr.f32.mxu0 0.0
    %165 = vmatmul.mubr.f32.gmra.mxu0 %v47
    %v166 = vpop.f32.mrf.mxu0
    %v167 = vadd.f32 %v38, %v166
    %v168 = vpop.f32.mrf.mxu0
    %169 = vmatprep.mubr.f32.mxu0 0.0
    %170 = vmatmul.mubr.f32.gmra.mxu0 %v50
    %v171 = vpop.f32.mrf.mxu0
    %v172 = vadd.f32 %v43, %v171
    %v173 = vpop.f32.mrf.mxu0
    %174 = vdwg.mxu0
    %v175 = vadd.f32 %v167, %v172
    %v176 = vrot.slane %v175, 4
    %v177 = vadd.f32 %v175, %v176
    %v178 = vrot.slane %v177, 2
    %v179 = vadd.f32 %v177, %v178
    %v180 = vrot.slane %v179, 1
    %v181 = vadd.f32 %v179, %v180
    %v182 = vrcp.pop 16.0
    %v183 = vmul.f32 %v181, %v182
    %v184 = vsub.f32 %v167, %v183
    %v185 = vsub.f32 %v172, %v183
    %v186 = vmul.f32 %v184, %v184
    %v187 = vmul.f32 %v185, %v185
    %v188 = vadd.f32 %v186, %v187
    %v189 = vrot.slane %v188, 4
    %v190 = vadd.f32 %v188, %v189
    %v191 = vrot.slane %v190, 2
    %v192 = vadd.f32 %v190, %v191
    %v193 = vrot.slane %v192, 1
    %v194 = vadd.f32 %v192, %v193
    %v195 = vmul.f32 %v194, %v182
    %v196 = vadd.f32 %v195, 1e-05
    %v197 = vrsqrt.pop %v196
    %v198 = vmul.f32 %v184, %v197
    %v199 = vmul.f32 %v185, %v197
    %200 = vset.pattern.permute.xlu0 1
    %201 = vperm.xlu0 %200, %v33
    %v202 = vpop.permute.xlu0 %201
    %204 = vset.pattern.permute.xlu0 1
    %205 = vperm.xlu0 %204, %v34
    %v206 = vpop.permute.xlu0 %205
    %v208 = vmul.f32 %v198, %v202
    %v209 = vmul.f32 %v199, %v206
    %210 = vset.pattern.permute.xlu0 2
    %211 = vperm.xlu0 %210, %v33
    %v212 = vpop.permute.xlu0 %211
    %214 = vset.pattern.permute.xlu0 2
    %215 = vperm.xlu0 %214, %v34
    %v216 = vpop.permute.xlu0 %215
    %v218 = vadd.f32 %v208, %v212
    %v219 = vadd.f32 %v209, %v216
    %v220 = vmin.f32 %v218, 20.0
    %v221 = vmin.f32 %v219, 20.0
    %v222 = vmul.f32 %v220, 1.442695
    %v223 = vpow.pop %v222
    %v224 = vmul.f32 %v221, 1.442695
    %v225 = vpow.pop %v224
    %v226 = vadd.f32 %v223, 2.0
    %v227 = vadd.f32 %v225, 2.0
    %v228 = vmul.f32 %v223, %v226
    %v229 = vmul.f32 %v225, %v227
    %v230 = vmul.f32 %v218, %v228
    %v231 = vmul.f32 %v219, %v229
    %v232 = vadd.f32 %v228, 2.0
    %v233 = vadd.f32 %v229, 2.0
    %v234 = vrcp.pop %v232
    %v235 = vmul.f32 %v230, %v234
    %v236 = vrcp.pop %v233
    %v237 = vmul.f32 %v231, %v236
    %v238 = vld [vmem:[%s1 + $0x10] sm:$0xff]
    %v239 = vld [vmem:[%s1 + $0x18] sm:$0xff]
    %240 = vset.pattern.permute.xlu0 3
    %241 = vperm.xlu0 %240, %v33
    %v242 = vpop.permute.xlu0 %241
    %244 = vset.pattern.permute.xlu0 3
    %245 = vperm.xlu0 %244, %v34
    %v246 = vpop.permute.xlu0 %245
    %vm248 = vcmask 130048
    %v250 = vsel %vm248, %v238, 0
    %v253 = vsel %vm248, %v239, 0
    %255 = vmatprep.subr.mxu0 0.0
    %256 = vmatpush1.msra.mxu0 0.0
    %257 = vmatprep.subr.mxu0 0.0
    %258 = vmatpush1.msra.mxu0 0.0
    %259 = vmatprep.subr.mxu0 0.0
    %260 = vmatpush1.msra.mxu0 0.0
    %261 = vmatprep.subr.mxu0 0.0
    %262 = vmatpush1.msra.mxu0 0.0
    %263 = vmatprep.subr.mxu0 0.0
    %264 = vmatpush1.msra.mxu0 0.0
    %265 = vmatprep.subr.mxu0 0.0
    %266 = vmatpush1.msra.mxu0 0.0
    %267 = vmatprep.subr.mxu0 0.0
    %268 = vmatpush1.msra.mxu0 0.0
    %269 = vmatprep.subr.mxu0 0.0
    %270 = vmatpush1.msra.mxu0 0.0
    %271 = vmatprep.subr.mxu0 0.0
    %272 = vmatpush1.msra.mxu0 0.0
    %273 = vmatprep.subr.mxu0 0.0
    %274 = vmatpush1.msra.mxu0 0.0
    %275 = vmatprep.subr.mxu0 0.0
    %276 = vmatpush1.msra.mxu0 0.0
    %277 = vmatprep.subr.mxu0 0.0
    %278 = vmatpush1.msra.mxu0 0.0
    %279 = vmatprep.subr.mxu0 0.0
    %280 = vmatpush1.msra.mxu0 0.0
    %281 = vmatprep.subr.mxu0 0.0
    %282 = vmatpush1.msra.mxu0 0.0
    %283 = vmatprep.subr.mxu0 0.0
    %284 = vmatpush1.msra.mxu0 %v237
    %285 = vmatprep.subr.mxu0 0.0
    %286 = vmatpush1.msra.mxu0 %v235
    %287 = vmatprep.subr.mxu0 0.0
    %288 = vmatpush2.msra.mxu0 0.0
    %289 = vmatprep.subr.mxu0 0.0
    %290 = vmatpush2.msra.mxu0 0.0
    %291 = vmatprep.subr.mxu0 0.0
    %292 = vmatpush2.msra.mxu0 0.0
    %293 = vmatprep.subr.mxu0 0.0
    %294 = vmatpush2.msra.mxu0 0.0
    %295 = vmatprep.subr.mxu0 0.0
    %296 = vmatpush2.msra.mxu0 0.0
    %297 = vmatprep.subr.mxu0 0.0
    %298 = vmatpush2.msra.mxu0 0.0
    %299 = vmatprep.subr.mxu0 0.0
    %300 = vmatpush2.msra.mxu0 0.0
    %301 = vmatprep.subr.mxu0 0.0
    %302 = vmatpush2.msra.mxu0 0.0
    %303 = vmatprep.subr.mxu0 0.0
    %304 = vmatpush2.msra.mxu0 0.0
    %305 = vmatprep.subr.mxu0 0.0
    %306 = vmatpush2.msra.mxu0 0.0
    %307 = vmatprep.subr.mxu0 0.0
    %308 = vmatpush2.msra.mxu0 0.0
    %309 = vmatprep.subr.mxu0 0.0
    %310 = vmatpush2.msra.mxu0 0.0
    %311 = vmatprep.subr.mxu0 0.0
    %312 = vmatpush2.msra.mxu0 0.0
    %313 = vmatprep.subr.mxu0 0.0
    %314 = vmatpush2.msra.mxu0 0.0
    %315 = vmatprep.subr.mxu0 0.0
    %316 = vmatpush2.msra.mxu0 0.0
    %317 = vmatprep.subr.mxu0 0.0
    %318 = vmatpush2.msra.mxu0 0.0
    %319 = vmatprep.mubr.f32.mxu0 0.0
    %320 = vmatmul.mubr.f32.gmra.mxu0 %v250
    %v321 = vpop.f32.mrf.mxu0
    %v322 = vadd.f32 %v242, %v321
    %v323 = vpop.f32.mrf.mxu0
    %324 = vmatprep.mubr.f32.mxu0 0.0
    %325 = vmatmul.mubr.f32.gmra.mxu0 %v253
    %v326 = vpop.f32.mrf.mxu0
    %v327 = vadd.f32 %v246, %v326
    %v328 = vpop.f32.mrf.mxu0
    %329 = vdwg.mxu0
    %v330 = vadd.f32 %v322, %v327
    %v331 = vrot.slane %v330, 4
    %v332 = vadd.f32 %v330, %v331
    %v333 = vrot.slane %v332, 2
    %v334 = vadd.f32 %v332, %v333
    %v335 = vrot.slane %v334, 1
    %v336 = vadd.f32 %v334, %v335
    %v337 = vmul.f32 %v336, %v182
    %v338 = vsub.f32 %v322, %v337
    %v339 = vsub.f32 %v327, %v337
    %v340 = vmul.f32 %v338, %v338
    %v341 = vmul.f32 %v339, %v339
    %v342 = vadd.f32 %v340, %v341
    %v343 = vrot.slane %v342, 4
    %v344 = vadd.f32 %v342, %v343
    %v345 = vrot.slane %v344, 2
    %v346 = vadd.f32 %v344, %v345
    %v347 = vrot.slane %v346, 1
    %v348 = vadd.f32 %v346, %v347
    %v349 = vmul.f32 %v348, %v182
    %v350 = vadd.f32 %v349, 1e-05
    %v351 = vrsqrt.pop %v350
    %v352 = vmul.f32 %v338, %v351
    %v353 = vmul.f32 %v339, %v351
    %354 = vset.pattern.permute.xlu0 4
    %355 = vperm.xlu0 %354, %v33
    %v356 = vpop.permute.xlu0 %355
    %358 = vset.pattern.permute.xlu0 4
    %359 = vperm.xlu0 %358, %v34
    %v360 = vpop.permute.xlu0 %359
    %v362 = vmul.f32 %v352, %v356
    %v363 = vmul.f32 %v353, %v360
    %364 = vset.pattern.permute.xlu0 5
    %365 = vperm.xlu0 %364, %v33
    %v366 = vpop.permute.xlu0 %365
    %368 = vset.pattern.permute.xlu0 5
    %369 = vperm.xlu0 %368, %v34
    %v370 = vpop.permute.xlu0 %369
    %v372 = vadd.f32 %v362, %v366
    %v373 = vadd.f32 %v363, %v370
    %v374 = vmin.f32 %v372, 20.0
    %v375 = vmin.f32 %v373, 20.0
    %v376 = vmul.f32 %v374, 1.442695
    %v377 = vpow.pop %v376
    %v378 = vmul.f32 %v375, 1.442695
    %v379 = vpow.pop %v378
    %v380 = vadd.f32 %v377, 2.0
    %v381 = vadd.f32 %v379, 2.0
    %v382 = vmul.f32 %v377, %v380
    %v383 = vmul.f32 %v379, %v381
    %v384 = vmul.f32 %v372, %v382
    %v385 = vmul.f32 %v373, %v383
    %v386 = vadd.f32 %v382, 2.0
    %v387 = vadd.f32 %v383, 2.0
    %v388 = vrcp.pop %v386
    %v389 = vmul.f32 %v384, %v388
    %v390 = vrcp.pop %v387
    %v391 = vmul.f32 %v385, %v390
    %v392 = vld [vmem:[%s1 + $0x20] sm:$0xff]
    %v393 = vld [vmem:[%s2] sm:$0xff]
    %395 = vset.pattern.permute.xlu0 6
    %396 = vperm.xlu0 %395, %v393
    %v397 = vpop.permute.xlu0 %396
    %v400 = vsel %vm248, %v392, 0
    %402 = vmatprep.subr.mxu0 0.0
    %403 = vmatpush1.msra.mxu0 0.0
    %404 = vmatprep.subr.mxu0 0.0
    %405 = vmatpush1.msra.mxu0 0.0
    %406 = vmatprep.subr.mxu0 0.0
    %407 = vmatpush1.msra.mxu0 0.0
    %408 = vmatprep.subr.mxu0 0.0
    %409 = vmatpush1.msra.mxu0 0.0
    %410 = vmatprep.subr.mxu0 0.0
    %411 = vmatpush1.msra.mxu0 0.0
    %412 = vmatprep.subr.mxu0 0.0
    %413 = vmatpush1.msra.mxu0 0.0
    %414 = vmatprep.subr.mxu0 0.0
    %415 = vmatpush1.msra.mxu0 0.0
    %416 = vmatprep.subr.mxu0 0.0
    %417 = vmatpush1.msra.mxu0 0.0
    %418 = vmatprep.subr.mxu0 0.0
    %419 = vmatpush1.msra.mxu0 0.0
    %420 = vmatprep.subr.mxu0 0.0
    %421 = vmatpush1.msra.mxu0 0.0
    %422 = vmatprep.subr.mxu0 0.0
    %423 = vmatpush1.msra.mxu0 0.0
    %424 = vmatprep.subr.mxu0 0.0
    %425 = vmatpush1.msra.mxu0 0.0
    %426 = vmatprep.subr.mxu0 0.0
    %427 = vmatpush1.msra.mxu0 0.0
    %428 = vmatprep.subr.mxu0 0.0
    %429 = vmatpush1.msra.mxu0 0.0
    %430 = vmatprep.subr.mxu0 0.0
    %431 = vmatpush1.msra.mxu0 %v391
    %432 = vmatprep.subr.mxu0 0.0
    %433 = vmatpush1.msra.mxu0 %v389
    %434 = vmatprep.subr.mxu0 0.0
    %435 = vmatpush2.msra.mxu0 0.0
    %436 = vmatprep.subr.mxu0 0.0
    %437 = vmatpush2.msra.mxu0 0.0
    %438 = vmatprep.subr.mxu0 0.0
    %439 = vmatpush2.msra.mxu0 0.0
    %440 = vmatprep.subr.mxu0 0.0
    %441 = vmatpush2.msra.mxu0 0.0
    %442 = vmatprep.subr.mxu0 0.0
    %443 = vmatpush2.msra.mxu0 0.0
    %444 = vmatprep.subr.mxu0 0.0
    %445 = vmatpush2.msra.mxu0 0.0
    %446 = vmatprep.subr.mxu0 0.0
    %447 = vmatpush2.msra.mxu0 0.0
    %448 = vmatprep.subr.mxu0 0.0
    %449 = vmatpush2.msra.mxu0 0.0
    %450 = vmatprep.subr.mxu0 0.0
    %451 = vmatpush2.msra.mxu0 0.0
    %452 = vmatprep.subr.mxu0 0.0
    %453 = vmatpush2.msra.mxu0 0.0
    %454 = vmatprep.subr.mxu0 0.0
    %455 = vmatpush2.msra.mxu0 0.0
    %456 = vmatprep.subr.mxu0 0.0
    %457 = vmatpush2.msra.mxu0 0.0
    %458 = vmatprep.subr.mxu0 0.0
    %459 = vmatpush2.msra.mxu0 0.0
    %460 = vmatprep.subr.mxu0 0.0
    %461 = vmatpush2.msra.mxu0 0.0
    %462 = vmatprep.subr.mxu0 0.0
    %463 = vmatpush2.msra.mxu0 0.0
    %464 = vmatprep.subr.mxu0 0.0
    %465 = vmatpush2.msra.mxu0 0.0
    %466 = vmatprep.mubr.f32.mxu0 0.0
    %467 = vmatmul.mubr.f32.gmra.mxu0 %v400
    %v468 = vpop.f32.mrf.mxu0
    %v469 = vadd.f32 %v397, %v468
    %v470 = vpop.f32.mrf.mxu0
    %471 = vdwg.mxu0
    %472 = vst [vmem:[#allocation2] sm:$0xff] %v469
    // Predicated region
    $region14: #{tpu_custom_call.1} parent=1 // pred_check
      _
    $region15: #{tpu_custom_call.1} parent=1 // pred_check_branch
      %474 = sbr.rel (0) target = $region17
    $region16: #{tpu_custom_call.1} parent=1 // pred_region
      %s476 = ssub.s32 128, 128
      %477 = vsyncadd [#allocation3], %s476
      %s479 = sshll.u32 [#allocation2], 4
      %s480 = int_to_ptr.vmem [resolvable:$true] %s479
      %482 = dma.vmem_to_hbm [thread:$0]  %s480, 128, %s3, [#allocation3]
    $region17: #{tpu_custom_call.1} parent=1 // pred_fallthru
      _
    // Predicated region
    $region18: #{tpu_custom_call.1} parent=1 // pred_check
      _
    $region19: #{tpu_custom_call.1} parent=1 // pred_check_branch
      %484 = sbr.rel (0) target = $region21
    $region20: #{tpu_custom_call.1} parent=1 // pred_region
      %485 = dma.done [#allocation3], 128
    $region21: #{tpu_custom_call.1} parent=1 // pred_fallthru
      _
    %486 = vsyncpa [#allocation3], 1

</llo_original>
